<compile_context>
chip_gen: v7x
topology: tpu7x:2x2x1
jax: 0.10.0
libtpu: 0.0.40
codegen_flags: <defaults>
</compile_context>

<pallas_src>
import functools

import jax
import jax.numpy as jnp
import numpy as np
from jax import lax
from jax.experimental import pallas as pl
from jax.experimental.pallas import tpu as pltpu


def _round_up(v, m):
    return ((v + m - 1) // m) * m


# -----------------------------------------------------------------------------
# Pallas kernel: one chunk of `b` lanes per grid step.
# -----------------------------------------------------------------------------
def gw_routing_kernel(params_ref, x_ref, out_ref, carry_ref, *,
                      seq_len, batch, time_lag):
    """params_ref : SMEM (6,) f32 = [logf, log_a, c0, f^(S-1), oo, f]
       x_ref      : VMEM (seq_pad8, chunk) f32  -- x^T chunk (t on sublanes, b on lanes)
       out_ref    : VMEM (8, chunk) f32 -- rows: h_n, c_n, Gate_oo, Gate_f, 0...
       carry_ref  : VMEM (1, 1) f32 scratch -- recurrent c at entry of this chunk
    """
    logf = params_ref[0]
    log_a = params_ref[1]          # log(A), A = f^seq_len
    c0 = params_ref[2]
    f_pow_sm1 = params_ref[3]      # f^(seq_len - 1)
    oo = params_ref[4]
    f = params_ref[5]

    i = pl.program_id(0)
    sp, bc = x_ref.shape
    b0 = i * bc

    @pl.when(i == 0)
    def _():
        carry_ref[...] = jnp.full((1, 1), c0, jnp.float32)

    # ---- (1) FIR over t on the MXU -------------------------------------------
    # row 0: Bfull_b = sum_t        f^(S-1-t) * x[b, t]   (full per-b carry update)
    # row 1: Brec_b  = sum_{t<=S-2} f^(S-2-t) * x[b, t]   (tap recorded at t = S-1)
    r8 = lax.broadcasted_iota(jnp.int32, (8, sp), 0)
    tt = lax.broadcasted_iota(jnp.int32, (8, sp), 1)
    k_fir = jnp.where(r8 == 0, (seq_len - 1) - tt, (seq_len - 2) - tt)
    w_fir = jnp.where(
        (k_fir >= 0) & (r8 < 2),
        jnp.exp(jnp.maximum(k_fir, 0).astype(jnp.float32) * logf),
        0.0)
    fir = jnp.dot(w_fir, x_ref[...], preferred_element_type=jnp.float32)  # (8, bc)
    brec_row = fir[1:2, :]                                                # (1, bc)

    # ---- (2) intra-chunk decayed prefix on the MXU ---------------------------
    lane = lax.broadcasted_iota(jnp.int32, (1, bc), 1)        # chunk-local b
    b_glob = lane + b0                                        # global b per lane
    active = b_glob >= time_lag                               # only j >= time_lag feed c
    rr = lax.broadcasted_iota(jnp.int32, (8, bc), 0)
    lhs = jnp.where((rr == 0) & active, fir, 0.0)             # row 0 = masked Bfull
    bfull_act = lhs[0:1, :]                                   # (1, bc)

    jj = lax.broadcasted_iota(jnp.int32, (bc, bc), 0)         # source j (chunk-local)
    bb = lax.broadcasted_iota(jnp.int32, (bc, bc), 1)         # target b (chunk-local)
    kk = bb - 1 - jj
    decay_m = jnp.where(
        kk >= 0,
        jnp.exp(jnp.maximum(kk, 0).astype(jnp.float32) * log_a),
        0.0)
    p_row = jnp.dot(lhs, decay_m, preferred_element_type=jnp.float32)[0:1, :]

    # ---- (3) carry-in c at entry of each b -----------------------------------
    # m_b = number of active outer steps in [chunk_start, b)
    m_b = jnp.clip(b_glob - time_lag, 0, lane)
    decay0 = jnp.exp(m_b.astype(jnp.float32) * log_a)
    c_in = decay0 * carry_ref[...] + p_row                    # (1, bc)

    # c recorded at entry of the last inner step (t = seq_len - 1)
    crec = f_pow_sm1 * c_in + brec_row                        # (1, bc)

    # ---- (4) serial carry to the next chunk ----------------------------------
    m_end = jnp.clip(b0 + bc - time_lag, 0, bc)
    a_m_end = jnp.exp(jnp.full((1, 1), m_end, jnp.int32).astype(jnp.float32) * log_a)
    w_carry = jnp.exp(((bc - 1) - lane).astype(jnp.float32) * log_a)
    carry_sum = jnp.sum(w_carry * bfull_act, axis=1, keepdims=True)       # (1, 1)
    carry_ref[...] = a_m_end * carry_ref[...] + carry_sum

    # ---- (5) lane-major output slab (unmasked lane-dense stores) -------------
    valid = active & (b_glob < batch)
    zero = jnp.zeros_like(crec)
    out_ref[0:1, :] = jnp.where(valid, oo * crec, zero)   # h_n
    out_ref[1:2, :] = jnp.where(valid, crec, zero)        # c_n
    out_ref[2:3, :] = jnp.where(valid, oo, 0.0)           # Gate_oo
    out_ref[3:4, :] = jnp.where(valid, f, 0.0)            # Gate_f
    out_ref[4:8, :] = jnp.zeros((4, bc), jnp.float32)


# -----------------------------------------------------------------------------
# Wrapper: scalar param prep, one padded layout, single pallas_call (jitted).
# -----------------------------------------------------------------------------
@functools.partial(jax.jit, static_argnums=(2,), static_argnames=("hidden_size",))
def mcpbrnn_gw_constant_routing(x, epoch, time_lag, y_obs, weight_r_yom,
                                hidden_size=1):
    """Forward pass of MCPBRNN_GWConstant_Routing.

    x            : (batch_size, seq_len) f32   (batch_first=True)
    epoch        : unused (kept for signature parity)
    time_lag     : python int (static)
    y_obs        : (batch_size, 1) f32 (only y_obs[0, 0] is used)
    weight_r_yom : (hidden_size, hidden_size) f32, hidden_size == 1

    Returns (h_n, c_n, Gate_oo, Gate_f), each (batch_size, hidden_size) f32.
    """
    del epoch  # unused in the reference forward
    assert hidden_size == 1, "reference module only broadcasts correctly for hidden_size == 1"

    x = jnp.asarray(x, jnp.float32)
    batch, seq_len = x.shape
    time_lag = int(time_lag)

    w00 = jnp.asarray(weight_r_yom, jnp.float32)[0, 0]
    y0 = jnp.asarray(y_obs, jnp.float32)[0, 0]

    # Scalar parameter prep: a handful of fused scalar ops under jit.
    oo = jax.nn.sigmoid(w00)
    f = 1.0 - oo
    f_safe = jnp.maximum(f, jnp.float32(1e-30))   # keep log finite (no -inf/NaN lanes)
    logf = jnp.log(f_safe)
    log_a = jnp.float32(seq_len) * logf           # log(f^seq_len)
    c0 = y0 / oo
    f_pow_sm1 = f_safe ** (seq_len - 1)
    params = jnp.stack([logf, log_a, c0, f_pow_sm1, oo, f]).astype(jnp.float32)

    # Single padded layout: x^T with t on sublanes, b on lanes.
    sp = _round_up(max(seq_len, 1), 8)
    chunk = min(256, _round_up(max(batch, 1), 128))   # <= 256 keeps v5e/v7x VMEM happy
    bp = _round_up(max(batch, 1), chunk)
    n_chunks = bp // chunk
    x_sb = jnp.zeros((sp, bp), jnp.float32).at[:seq_len, :batch].set(x.T)

    kernel = functools.partial(gw_routing_kernel, seq_len=seq_len,
                               batch=batch, time_lag=time_lag)

    out = pl.pallas_call(
        kernel,
        out_shape=jax.ShapeDtypeStruct((8, bp), jnp.float32),
        grid=(n_chunks,),
        in_specs=[
            pl.BlockSpec(memory_space=pltpu.MemorySpace.SMEM),       # params (whole array)
            pl.BlockSpec((sp, chunk), lambda i: (0, i)),             # x^T chunk
        ],
        out_specs=pl.BlockSpec((8, chunk), lambda i: (0, i)),
        scratch_shapes=[pltpu.VMEM((1, 1), jnp.float32)],            # serial c carry
        compiler_params=pltpu.CompilerParams(
            dimension_semantics=("arbitrary",),                      # serial carry over chunks
            vmem_limit_bytes=32 * 1024 * 1024,
        ),
    )(params, x_sb)

    h_n = out[0, :batch].reshape(batch, hidden_size)
    c_n = out[1, :batch].reshape(batch, hidden_size)
    gate_oo = out[2, :batch].reshape(batch, hidden_size)
    gate_f = out[3, :batch].reshape(batch, hidden_size)
    return h_n, c_n, gate_oo, gate_f


# -----------------------------------------------------------------------------
# Pure numpy reference (direct transcription of the PyTorch forward).
# -----------------------------------------------------------------------------
def reference_forward(x, time_lag, y_obs, weight_r_yom):
    x = np.asarray(x, np.float32)
    y_obs = np.asarray(y_obs, np.float32)
    w = np.asarray(weight_r_yom, np.float32)

    batch_size, seq_len = x.shape
    H = 1
    oo = 1.0 / (1.0 + np.exp(-w[0, 0], dtype=np.float32))
    f = np.float32(1.0) - oo
    c = y_obs[0, 0] / oo  # scalar (hidden_size == 1)

    h_n = np.zeros((batch_size, H), np.float32)
    c_n = np.zeros((batch_size, H), np.float32)
    g_oo = np.zeros((batch_size, H), np.float32)
    g_f = np.zeros((batch_size, H), np.float32)

    for b in range(time_lag, batch_size):
        for t in range(seq_len):
            u = x[b, t]                  # x[t, b, 0] after the transpose
            c1 = f * c + u
            h_n[b, :] = oo * c           # h_0 + bp_0, bp_0 = 0
            c_n[b, :] = c
            g_oo[b, :] = oo
            g_f[b, :] = f
            c = c1
    return h_n, c_n, g_oo, g_f


# -----------------------------------------------------------------------------
# Main
# -----------------------------------------------------------------------------
if __name__ == "__main__":
    key = jax.random.PRNGKey(0)
    k_x, k_y, k_w = jax.random.split(key, 3)

    batch_size = 16   # acts as the time dimension in this module
    seq_len = 8
    hidden_size = 1
    time_lag = 2
    epoch = 0

    x = jax.random.uniform(k_x, (batch_size, seq_len), jnp.float32)
    y_obs = jax.random.uniform(k_y, (batch_size, 1), jnp.float32) + 0.5
    # torch.rand(hidden_size, hidden_size) -> uniform [0, 1)
    weight_r_yom = jax.random.uniform(k_w, (hidden_size, hidden_size), jnp.float32)

    outs = mcpbrnn_gw_constant_routing(x, epoch, time_lag, y_obs, weight_r_yom,
                                       hidden_size=hidden_size)
    outs = jax.block_until_ready(outs)
    h_n, c_n, gate_oo, gate_f = [np.asarray(o) for o in outs]

    # Verify against the direct transcription of the PyTorch forward.
    # (The vectorized form reassociates the f32 sums; tolerances cover that.)
    r_h, r_c, r_oo, r_f = reference_forward(x, time_lag, y_obs, weight_r_yom)
    np.testing.assert_allclose(h_n, r_h, rtol=1e-4, atol=1e-4)
    np.testing.assert_allclose(c_n, r_c, rtol=1e-4, atol=1e-4)
    np.testing.assert_allclose(gate_oo, r_oo, rtol=1e-5, atol=1e-6)
    np.testing.assert_allclose(gate_f, r_f, rtol=1e-5, atol=1e-6)

    # Extra check: exercise the multi-chunk serial carry (2 x 256-lane chunks).
    b2, tl2 = 300, 5
    x2 = jax.random.uniform(jax.random.PRNGKey(1), (b2, seq_len), jnp.float32)
    outs2 = jax.block_until_ready(
        mcpbrnn_gw_constant_routing(x2, epoch, tl2, y_obs, weight_r_yom,
                                    hidden_size=hidden_size))
    ref2 = reference_forward(x2, tl2, y_obs, weight_r_yom)
    for got, want in zip(outs2, ref2):
        np.testing.assert_allclose(np.asarray(got), want, rtol=2e-4, atol=2e-4)

    print("KERNEL_OK")
</pallas_src>

<mosaic_0001>
module attributes {stable_mosaic.version = 11 : i64} {
  func.func @gw_routing_kernel(%arg0: i32, %arg1: memref<6xf32, #tpu.memory_space<smem>>, %arg2: memref<8x128xf32, #tpu.memory_space<vmem>>, %arg3: memref<8x128xf32, #tpu.memory_space<vmem>>, %arg4: memref<1x1xf32, #tpu.memory_space<vmem>>) attributes {dimension_semantics = [#tpu.dimension_semantics<arbitrary>], iteration_bounds = array<i64: 1>, scalar_prefetch = 0 : i64, scratch_operands = 1 : i64, tpu.core_type = #tpu.core_type<tc>, window_params = [{transform_indices = @transform_0, window_bounds = array<i64: 6>}, {transform_indices = @transform_1, window_bounds = array<i64: 8, 128>}, {transform_indices = @transform_2, window_bounds = array<i64: 8, 128>}]} {
    %c0 = arith.constant 0 : index
    %0 = memref.load %arg1[%c0] : memref<6xf32, #tpu.memory_space<smem>>
    %c1 = arith.constant 1 : index
    %1 = memref.load %arg1[%c1] : memref<6xf32, #tpu.memory_space<smem>>
    %c2 = arith.constant 2 : index
    %2 = memref.load %arg1[%c2] : memref<6xf32, #tpu.memory_space<smem>>
    %c3 = arith.constant 3 : index
    %3 = memref.load %arg1[%c3] : memref<6xf32, #tpu.memory_space<smem>>
    %c4 = arith.constant 4 : index
    %4 = memref.load %arg1[%c4] : memref<6xf32, #tpu.memory_space<smem>>
    %c5 = arith.constant 5 : index
    %5 = memref.load %arg1[%c5] : memref<6xf32, #tpu.memory_space<smem>>
    %c128_i32 = arith.constant 128 : i32
    %6 = arith.muli %arg0, %c128_i32 : i32
    %c0_i32 = arith.constant 0 : i32
    %7 = arith.cmpi eq, %arg0, %c0_i32 : i32
    %8 = arith.extui %7 : i1 to i32
    %c0_i32_0 = arith.constant 0 : i32
    %9 = arith.cmpi ne, %8, %c0_i32_0 : i32
    scf.if %9 {
      %123 = vector.broadcast %2 : f32 to vector<1x1xf32>
      %c0_41 = arith.constant 0 : index
      %c0_42 = arith.constant 0 : index
      %124 = vector.load %arg4[%c0_41, %c0_42] : memref<1x1xf32, #tpu.memory_space<vmem>>, vector<1x1xf32>
      tpu.vector_store %arg4[%c0_41, %c0_42], %123 {strides = array<i32>} : memref<1x1xf32, #tpu.memory_space<vmem>>, vector<1x1xf32>,
    } else {
    }
    %10 = tpu.iota {dimensions = array<i32: 0>} : vector<8x8xi32>
    %11 = tpu.iota {dimensions = array<i32: 1>} : vector<8x8xi32>
    %c0_i32_1 = arith.constant 0 : i32
    %12 = vector.broadcast %c0_i32_1 : i32 to vector<8x8xi32>
    %13 = arith.cmpi eq, %10, %12 : vector<8x8xi32>
    %c7_i32 = arith.constant 7 : i32
    %14 = vector.broadcast %c7_i32 : i32 to vector<8x8xi32>
    %15 = arith.subi %14, %11 : vector<8x8xi32>
    %c6_i32 = arith.constant 6 : i32
    %16 = vector.broadcast %c6_i32 : i32 to vector<8x8xi32>
    %17 = arith.subi %16, %11 : vector<8x8xi32>
    %18 = arith.select %13, %15, %17 : vector<8x8xi1>, vector<8x8xi32>
    %c0_i32_2 = arith.constant 0 : i32
    %19 = vector.broadcast %c0_i32_2 : i32 to vector<8x8xi32>
    %20 = arith.cmpi sge, %18, %19 : vector<8x8xi32>
    %c2_i32 = arith.constant 2 : i32
    %21 = vector.broadcast %c2_i32 : i32 to vector<8x8xi32>
    %22 = arith.cmpi slt, %10, %21 : vector<8x8xi32>
    %23 = arith.andi %20, %22 : vector<8x8xi1>
    %c0_i32_3 = arith.constant 0 : i32
    %24 = vector.broadcast %c0_i32_3 : i32 to vector<8x8xi32>
    %25 = arith.maxsi %18, %24 : vector<8x8xi32>
    %26 = arith.sitofp %25 : vector<8x8xi32> to vector<8x8xf32>
    %27 = vector.broadcast %0 : f32 to vector<8x8xf32>
    %28 = arith.mulf %26, %27 : vector<8x8xf32>
    %29 = math.exp %28 : vector<8x8xf32>
    %cst = arith.constant 0.000000e+00 : f32
    %30 = vector.broadcast %cst : f32 to vector<8x8xf32>
    %31 = arith.select %23, %29, %30 : vector<8x8xi1>, vector<8x8xf32>
    %c0_4 = arith.constant 0 : index
    %c0_5 = arith.constant 0 : index
    %32 = vector.load %arg2[%c0_4, %c0_5] : memref<8x128xf32, #tpu.memory_space<vmem>>, vector<8x128xf32>
    %cst_6 = arith.constant dense<0.000000e+00> : vector<8x128xf32>
    %33 = tpu.matmul %31, %32, %cst_6 {dimension_numbers = #tpu.dot_dimension_numbers<[1], [0], [0], [1], [0, 0, 1, 1], [], []>} : vector<8x8xf32>, vector<8x128xf32>, vector<8x128xf32> -> vector<8x128xf32>
    %34 = vector.extract_strided_slice %33 {offsets = [1, 0], sizes = [1, 128], strides = [1, 1]} : vector<8x128xf32> to vector<1x128xf32>
    %35 = tpu.iota {dimensions = array<i32: 1>} : vector<1x128xi32>
    %36 = vector.broadcast %6 : i32 to vector<1x128xi32>
    %37 = arith.addi %35, %36 : vector<1x128xi32>
    %c2_i32_7 = arith.constant 2 : i32
    %38 = vector.broadcast %c2_i32_7 : i32 to vector<1x128xi32>
    %39 = arith.cmpi sge, %37, %38 : vector<1x128xi32>
    %40 = tpu.iota {dimensions = array<i32: 0>} : vector<8x128xi32>
    %c0_i32_8 = arith.constant 0 : i32
    %41 = vector.broadcast %c0_i32_8 : i32 to vector<8x128xi32>
    %42 = arith.cmpi eq, %40, %41 : vector<8x128xi32>
    %43 = vector.broadcast %39 : vector<1x128xi1> to vector<8x128xi1>
    %44 = arith.andi %42, %43 : vector<8x128xi1>
    %cst_9 = arith.constant 0.000000e+00 : f32
    %45 = vector.broadcast %cst_9 : f32 to vector<8x128xf32>
    %46 = arith.select %44, %33, %45 : vector<8x128xi1>, vector<8x128xf32>
    %47 = vector.extract_strided_slice %46 {offsets = [0, 0], sizes = [1, 128], strides = [1, 1]} : vector<8x128xf32> to vector<1x128xf32>
    %48 = tpu.iota {dimensions = array<i32: 0>} : vector<128x128xi32>
    %49 = tpu.iota {dimensions = array<i32: 1>} : vector<128x128xi32>
    %c1_i32 = arith.constant 1 : i32
    %50 = vector.broadcast %c1_i32 : i32 to vector<128x128xi32>
    %51 = arith.subi %49, %50 : vector<128x128xi32>
    %52 = arith.subi %51, %48 : vector<128x128xi32>
    %c0_i32_10 = arith.constant 0 : i32
    %53 = vector.broadcast %c0_i32_10 : i32 to vector<128x128xi32>
    %54 = arith.cmpi sge, %52, %53 : vector<128x128xi32>
    %c0_i32_11 = arith.constant 0 : i32
    %55 = vector.broadcast %c0_i32_11 : i32 to vector<128x128xi32>
    %56 = arith.maxsi %52, %55 : vector<128x128xi32>
    %57 = arith.sitofp %56 : vector<128x128xi32> to vector<128x128xf32>
    %58 = vector.broadcast %1 : f32 to vector<128x128xf32>
    %59 = arith.mulf %57, %58 : vector<128x128xf32>
    %60 = math.exp %59 : vector<128x128xf32>
    %cst_12 = arith.constant 0.000000e+00 : f32
    %61 = vector.broadcast %cst_12 : f32 to vector<128x128xf32>
    %62 = arith.select %54, %60, %61 : vector<128x128xi1>, vector<128x128xf32>
    %cst_13 = arith.constant dense<0.000000e+00> : vector<8x128xf32>
    %63 = tpu.matmul %46, %62, %cst_13 {dimension_numbers = #tpu.dot_dimension_numbers<[1], [0], [0], [1], [0, 0, 1, 1], [], []>} : vector<8x128xf32>, vector<128x128xf32>, vector<8x128xf32> -> vector<8x128xf32>
    %64 = vector.extract_strided_slice %63 {offsets = [0, 0], sizes = [1, 128], strides = [1, 1]} : vector<8x128xf32> to vector<1x128xf32>
    %c2_i32_14 = arith.constant 2 : i32
    %65 = vector.broadcast %c2_i32_14 : i32 to vector<1x128xi32>
    %66 = arith.subi %37, %65 : vector<1x128xi32>
    %c0_i32_15 = arith.constant 0 : i32
    %67 = vector.broadcast %c0_i32_15 : i32 to vector<1x128xi32>
    %68 = arith.maxsi %67, %66 : vector<1x128xi32>
    %69 = arith.minsi %35, %68 : vector<1x128xi32>
    %70 = arith.sitofp %69 : vector<1x128xi32> to vector<1x128xf32>
    %71 = vector.broadcast %1 : f32 to vector<1x128xf32>
    %72 = arith.mulf %70, %71 : vector<1x128xf32>
    %73 = math.exp %72 : vector<1x128xf32>
    %c0_16 = arith.constant 0 : index
    %c0_17 = arith.constant 0 : index
    %74 = vector.load %arg4[%c0_16, %c0_17] : memref<1x1xf32, #tpu.memory_space<vmem>>, vector<1x1xf32>
    %75 = vector.broadcast %74 : vector<1x1xf32> to vector<1x128xf32>
    %76 = arith.mulf %73, %75 : vector<1x128xf32>
    %77 = arith.addf %76, %64 : vector<1x128xf32>
    %78 = vector.broadcast %3 : f32 to vector<1x128xf32>
    %79 = arith.mulf %78, %77 : vector<1x128xf32>
    %80 = arith.addf %79, %34 : vector<1x128xf32>
    %c128_i32_18 = arith.constant 128 : i32
    %81 = arith.addi %6, %c128_i32_18 : i32
    %c2_i32_19 = arith.constant 2 : i32
    %82 = arith.subi %81, %c2_i32_19 : i32
    %c0_i32_20 = arith.constant 0 : i32
    %c128_i32_21 = arith.constant 128 : i32
    %83 = arith.maxsi %c0_i32_20, %82 : i32
    %84 = arith.minsi %c128_i32_21, %83 : i32
    %85 = vector.broadcast %84 : i32 to vector<1x1xi32>
    %86 = arith.sitofp %85 : vector<1x1xi32> to vector<1x1xf32>
    %87 = vector.broadcast %1 : f32 to vector<1x1xf32>
    %88 = arith.mulf %86, %87 : vector<1x1xf32>
    %89 = math.exp %88 : vector<1x1xf32>
    %c127_i32 = arith.constant 127 : i32
    %90 = vector.broadcast %c127_i32 : i32 to vector<1x128xi32>
    %91 = arith.subi %90, %35 : vector<1x128xi32>
    %92 = arith.sitofp %91 : vector<1x128xi32> to vector<1x128xf32>
    %93 = vector.broadcast %1 : f32 to vector<1x128xf32>
    %94 = arith.mulf %92, %93 : vector<1x128xf32>
    %95 = math.exp %94 : vector<1x128xf32>
    %96 = arith.mulf %95, %47 : vector<1x128xf32>
    %cst_22 = arith.constant dense<0.000000e+00> : vector<1xf32>
    %97 = vector.multi_reduction <add>, %96, %cst_22 [1] : vector<1x128xf32> to vector<1xf32>
    %98 = vector.shape_cast %97 : vector<1xf32> to vector<1x1xf32>
    %c0_23 = arith.constant 0 : index
    %c0_24 = arith.constant 0 : index
    %99 = vector.load %arg4[%c0_23, %c0_24] : memref<1x1xf32, #tpu.memory_space<vmem>>, vector<1x1xf32>
    %100 = arith.mulf %89, %99 : vector<1x1xf32>
    %101 = arith.addf %100, %98 : vector<1x1xf32>
    %c0_25 = arith.constant 0 : index
    %c0_26 = arith.constant 0 : index
    %102 = vector.load %arg4[%c0_25, %c0_26] : memref<1x1xf32, #tpu.memory_space<vmem>>, vector<1x1xf32>
    tpu.vector_store %arg4[%c0_25, %c0_26], %101 {strides = array<i32>} : memref<1x1xf32, #tpu.memory_space<vmem>>, vector<1x1xf32>,
    %c16_i32 = arith.constant 16 : i32
    %103 = vector.broadcast %c16_i32 : i32 to vector<1x128xi32>
    %104 = arith.cmpi slt, %37, %103 : vector<1x128xi32>
    %105 = arith.andi %39, %104 : vector<1x128xi1>
    %cst_27 = arith.constant 0.000000e+00 : f32
    %106 = vector.broadcast %cst_27 : f32 to vector<1x128xf32>
    %107 = vector.broadcast %4 : f32 to vector<1x128xf32>
    %108 = arith.mulf %107, %80 : vector<1x128xf32>
    %109 = arith.select %105, %108, %106 : vector<1x128xi1>, vector<1x128xf32>
    %c0_28 = arith.constant 0 : index
    %c0_29 = arith.constant 0 : index
    %110 = vector.load %arg3[%c0_28, %c0_29] : memref<8x128xf32, #tpu.memory_space<vmem>>, vector<1x128xf32>
    tpu.vector_store %arg3[%c0_28, %c0_29], %109 {strides = array<i32>} : memref<8x128xf32, #tpu.memory_space<vmem>>, vector<1x128xf32>,
    %111 = arith.select %105, %80, %106 : vector<1x128xi1>, vector<1x128xf32>
    %c1_30 = arith.constant 1 : index
    %c0_31 = arith.constant 0 : index
    %112 = vector.load %arg3[%c1_30, %c0_31] : memref<8x128xf32, #tpu.memory_space<vmem>>, vector<1x128xf32>
    tpu.vector_store %arg3[%c1_30, %c0_31], %111 {strides = array<i32>} : memref<8x128xf32, #tpu.memory_space<vmem>>, vector<1x128xf32>,
    %cst_32 = arith.constant 0.000000e+00 : f32
    %113 = vector.broadcast %4 : f32 to vector<1x128xf32>
    %114 = vector.broadcast %cst_32 : f32 to vector<1x128xf32>
    %115 = arith.select %105, %113, %114 : vector<1x128xi1>, vector<1x128xf32>
    %c2_33 = arith.constant 2 : index
    %c0_34 = arith.constant 0 : index
    %116 = vector.load %arg3[%c2_33, %c0_34] : memref<8x128xf32, #tpu.memory_space<vmem>>, vector<1x128xf32>
    tpu.vector_store %arg3[%c2_33, %c0_34], %115 {strides = array<i32>} : memref<8x128xf32, #tpu.memory_space<vmem>>, vector<1x128xf32>,
    %cst_35 = arith.constant 0.000000e+00 : f32
    %117 = vector.broadcast %5 : f32 to vector<1x128xf32>
    %118 = vector.broadcast %cst_35 : f32 to vector<1x128xf32>
    %119 = arith.select %105, %117, %118 : vector<1x128xi1>, vector<1x128xf32>
    %c3_36 = arith.constant 3 : index
    %c0_37 = arith.constant 0 : index
    %120 = vector.load %arg3[%c3_36, %c0_37] : memref<8x128xf32, #tpu.memory_space<vmem>>, vector<1x128xf32>
    tpu.vector_store %arg3[%c3_36, %c0_37], %119 {strides = array<i32>} : memref<8x128xf32, #tpu.memory_space<vmem>>, vector<1x128xf32>,
    %cst_38 = arith.constant 0.000000e+00 : f32
    %121 = vector.broadcast %cst_38 : f32 to vector<4x128xf32>
    %c4_39 = arith.constant 4 : index
    %c0_40 = arith.constant 0 : index
    %122 = vector.load %arg3[%c4_39, %c0_40] : memref<8x128xf32, #tpu.memory_space<vmem>>, vector<4x128xf32>
    tpu.vector_store %arg3[%c4_39, %c0_40], %121 {strides = array<i32>} : memref<8x128xf32, #tpu.memory_space<vmem>>, vector<4x128xf32>,
    return
  }
  func.func @transform_0(%arg0: i32) -> i32 {
    %c0_i32 = arith.constant 0 : i32
    %c0_i32_0 = arith.constant 0 : i32
    return %c0_i32 : i32
  }
  func.func @transform_1(%arg0: i32) -> (i32, i32) {
    %c0_i32 = arith.constant 0 : i32
    %c0_i32_0 = arith.constant 0 : i32
    return %c0_i32, %arg0 : i32, i32
  }
  func.func @transform_2(%arg0: i32) -> (i32, i32) {
    %c0_i32 = arith.constant 0 : i32
    %c0_i32_0 = arith.constant 0 : i32
    return %c0_i32, %arg0 : i32, i32
  }
}

</mosaic_0001>

<llo_original>
// kernel: mcpbrnn_gw_constant_routing.1
$region0: #{mcpbrnn_gw_constant_routing.1}
  #allocation0 [shape = 'u32[]', space=smem, size = 0x4, offset = 0x4, fixed_abs, tag = 'smem constant byte address 0x4 - core index']
  #allocation1 [shape = 'u32[144,128]{1,0:T(1,128)}', space=vmem, size = 0x12000, scoped, tag = 'internal scratch']
  #allocation2 [shape = 'f32[1,1]{1,0:T(1,128)}', space=vmem, size = 0x200, scoped, tag = 'scratch operand']
  %s0 = inlined_call_operand.vmem [shape: f32[6], index: 0, kind: input, shape index: {}]
  %s1 = inlined_call_operand.vmem [shape: f32[8,128], index: 1, kind: input, shape index: {}]
  %s2 = inlined_call_operand.vmem [shape: f32[8,128], index: 2, kind: output, shape index: {}]
  %s3 = sld [smem:[#allocation0]]
  $region26: #{mcpbrnn_gw_constant_routing.1} parent=0
    _
  %s5 = ssub.s32 1, %s3
  %s6 = scalar_select 0, %s5, %s3
  $region1: #{mcpbrnn_gw_constant_routing.1} parent=0
    #allocation3 [shape = 'u8[512]{0}', space=smem, size = 0x200, scoped, tag = 'input window, operand 0, single buffered']
    #allocation4 [shape = 's32[1]{0}', space=sflag, size = 0x4, scoped, tag = 'scoped memory for mcpbrnn_gw_constant_routing.1']
    %7 = vsyncpa [#allocation4], 0
    // Predicated region
    $region2: #{mcpbrnn_gw_constant_routing.1} parent=1 // pred_check
      _
    $region3: #{mcpbrnn_gw_constant_routing.1} parent=1 // pred_check_branch
      %9 = sbr.rel (0) target = $region5
    $region4: #{mcpbrnn_gw_constant_routing.1} parent=1 // pred_region
      %s11 = ssub.s32 16, 16
      %12 = vsyncadd [#allocation4], %s11
      %s14 = sshll.u32 %s0, 4
      %s15 = int_to_ptr.vmem [resolvable:$true] %s14
      %17 = dma.vmem_to_smem %s15, 16, [#allocation3], [#allocation4]
    $region5: #{mcpbrnn_gw_constant_routing.1} parent=1 // pred_fallthru
      _
    // Predicated region
    $region6: #{mcpbrnn_gw_constant_routing.1} parent=1 // pred_check
      _
    $region7: #{mcpbrnn_gw_constant_routing.1} parent=1 // pred_check_branch
      %19 = sbr.rel (0) target = $region9
    $region8: #{mcpbrnn_gw_constant_routing.1} parent=1 // pred_region
      _
    $region9: #{mcpbrnn_gw_constant_routing.1} parent=1 // pred_fallthru
      _
    // Predicated region
    $region10: #{mcpbrnn_gw_constant_routing.1} parent=1 // pred_check
      _
    $region11: #{mcpbrnn_gw_constant_routing.1} parent=1 // pred_check_branch
      %21 = sbr.rel (0) target = $region13
    $region12: #{mcpbrnn_gw_constant_routing.1} parent=1 // pred_region
      %22 = dma.done [#allocation4], 16
    $region13: #{mcpbrnn_gw_constant_routing.1} parent=1 // pred_fallthru
      _
    %23 = sfence
    %s24 = sld [smem:[#allocation3]]
    %s25 = sld [smem:[#allocation3 + $0x1]]
    %s26 = sld [smem:[#allocation3 + $0x2]]
    %s27 = sld [smem:[#allocation3 + $0x3]]
    %s28 = sld [smem:[#allocation3 + $0x4]]
    %s29 = sld [smem:[#allocation3 + $0x5]]
    %s30 = smul.u32 0, 128
    %p31 = scmp.eq.s32.totalorder 0, 0
    // Predicated region
    $region14: #{mcpbrnn_gw_constant_routing.1} parent=1 // pred_check
      %p32 = pneg %p31
    $region15: #{mcpbrnn_gw_constant_routing.1} parent=1 // pred_check_branch
      %34 = sbr.rel (%p32) target = $region17
    $region16: #{mcpbrnn_gw_constant_routing.1} parent=1 // pred_region
      %v35 = vstv %s26
      %vm36 = vcmask 0
      %37 = vst.msk [vmem:[#allocation2] sm:$0x1] %vm36, %v35
    $region17: #{mcpbrnn_gw_constant_routing.1} parent=1 // pred_fallthru
      _
    %v38 = vlaneseq
    %v39 = vshrl.u32 %v38, 7
    %v40 = vlaneseq
    %v41 = vand.u32 %v40, 127
    %vm42 = vcmp.eq.s32.totalorder %v39, 0
    %v43 = vsub.s32 7, %v41
    %v44 = vsub.s32 6, %v41
    %v45 = vsel %vm42, %v43, %v44
    %vm46 = vcmp.ge.s32.totalorder %v45, 0
    %vm47 = vcmp.lt.s32.totalorder %v39, 2
    %vm48 = vmand %vm46, %vm47
    %vm49 = vcmp.gt.s32.totalorder %v45, 0
    %v50 = vsel %vm49, %v45, 0
    %v51 = vcvt.s32.f32 %v50
    %v52 = vstv %s24
    %v53 = vmul.f32 %v51, %v52
    %v54 = vmul.f32 %v53, 1.442695
    %v55 = vpow.pop %v54
    %v56 = vsel %vm48, %v55, 0.0
    %v57 = vld [vmem:[%s1] sm:$0xff]
    %vm58 = vcmask 64512
    %v60 = vsel %vm58, %v56, 0
    %62 = vmatprep.subr.mxu0 0.0
    %63 = vmatpush1.msra.mxu0 %v57
    %64 = vmatprep.subr.mxu0 0.0
    %65 = vmatpush1.msra.mxu0 0.0
    %66 = vmatprep.subr.mxu0 0.0
    %67 = vmatpush1.msra.mxu0 0.0
    %68 = vmatprep.subr.mxu0 0.0
    %69 = vmatpush1.msra.mxu0 0.0
    %70 = vmatprep.subr.mxu0 0.0
    %71 = vmatpush1.msra.mxu0 0.0
    %72 = vmatprep.subr.mxu0 0.0
    %73 = vmatpush1.msra.mxu0 0.0
    %74 = vmatprep.subr.mxu0 0.0
    %75 = vmatpush1.msra.mxu0 0.0
    %76 = vmatprep.subr.mxu0 0.0
    %77 = vmatpush1.msra.mxu0 0.0
    %78 = vmatprep.subr.mxu0 0.0
    %79 = vmatpush1.msra.mxu0 0.0
    %80 = vmatprep.subr.mxu0 0.0
    %81 = vmatpush1.msra.mxu0 0.0
    %82 = vmatprep.subr.mxu0 0.0
    %83 = vmatpush1.msra.mxu0 0.0
    %84 = vmatprep.subr.mxu0 0.0
    %85 = vmatpush1.msra.mxu0 0.0
    %86 = vmatprep.subr.mxu0 0.0
    %87 = vmatpush1.msra.mxu0 0.0
    %88 = vmatprep.subr.mxu0 0.0
    %89 = vmatpush1.msra.mxu0 0.0
    %90 = vmatprep.subr.mxu0 0.0
    %91 = vmatpush1.msra.mxu0 0.0
    %92 = vmatprep.subr.mxu0 0.0
    %93 = vmatpush1.msra.mxu0 0.0
    %94 = vmatprep.subr.mxu0 0.0
    %95 = vmatpush1.msra.mxu0 0.0
    %96 = vmatprep.subr.mxu0 0.0
    %97 = vmatpush1.msra.mxu0 0.0
    %98 = vmatprep.subr.mxu0 0.0
    %99 = vmatpush1.msra.mxu0 0.0
    %100 = vmatprep.subr.mxu0 0.0
    %101 = vmatpush1.msra.mxu0 0.0
    %102 = vmatprep.subr.mxu0 0.0
    %103 = vmatpush1.msra.mxu0 0.0
    %104 = vmatprep.subr.mxu0 0.0
    %105 = vmatpush1.msra.mxu0 0.0
    %106 = vmatprep.subr.mxu0 0.0
    %107 = vmatpush1.msra.mxu0 0.0
    %108 = vmatprep.subr.mxu0 0.0
    %109 = vmatpush1.msra.mxu0 0.0
    %110 = vmatprep.subr.mxu0 0.0
    %111 = vmatpush1.msra.mxu0 0.0
    %112 = vmatprep.subr.mxu0 0.0
    %113 = vmatpush1.msra.mxu0 0.0
    %114 = vmatprep.subr.mxu0 0.0
    %115 = vmatpush1.msra.mxu0 0.0
    %116 = vmatprep.subr.mxu0 0.0
    %117 = vmatpush1.msra.mxu0 0.0
    %118 = vmatprep.subr.mxu0 0.0
    %119 = vmatpush1.msra.mxu0 0.0
    %120 = vmatprep.subr.mxu0 0.0
    %121 = vmatpush1.msra.mxu0 0.0
    %122 = vmatprep.subr.mxu0 0.0
    %123 = vmatpush1.msra.mxu0 0.0
    %124 = vmatprep.subr.mxu0 0.0
    %125 = vmatpush1.msra.mxu0 0.0
    %126 = vmatprep.mubr.f32.mxu0 0.0
    %127 = vmatmul.mubr.f32.gmra.mrb[0].mxu0 %v60
    %v128 = vpop.f32.mrb[0].mxu0
    %v129 = vadd.f32 0.0, %v128
    %v130 = vpop.f32.mrb[0].mxu0
    %131 = vdwg.mxu0
    %v132 = vstv %s30
    %v133 = vadd.s32 %v41, %v132
    %vm134 = vcmp.ge.s32.totalorder %v133, 2
    %v135 = vsel %vm134, 1, 0
    %vm136 = vcmp.eq.s32.totalorder %v135, 1
    %vm137 = vmand %vm42, %vm136
    %v138 = vsel %vm137, %v129, 0.0
    %v139 = vadd.s32 %v39, 8
    %v140 = vadd.s32 %v39, 16
    %v141 = vadd.s32 %v39, 24
    %v142 = vadd.s32 %v39, 32
    %v143 = vadd.s32 %v39, 40
    %v144 = vadd.s32 %v39, 48
    %v145 = vadd.s32 %v39, 56
    %v146 = vadd.s32 %v39, 64
    %v147 = vadd.s32 %v39, 72
    %v148 = vadd.s32 %v39, 80
    %v149 = vadd.s32 %v39, 88
    %v150 = vadd.s32 %v39, 96
    %v151 = vadd.s32 %v39, 104
    %v152 = vadd.s32 %v39, 112
    %v153 = vadd.s32 %v39, 120
    %v154 = vsub.s32 %v41, 1
    %v155 = vsub.s32 %v154, %v39
    %v156 = vsub.s32 %v154, %v139
    %v157 = vsub.s32 %v154, %v140
    %v158 = vsub.s32 %v154, %v141
    %v159 = vsub.s32 %v154, %v142
    %v160 = vsub.s32 %v154, %v143
    %v161 = vsub.s32 %v154, %v144
    %v162 = vsub.s32 %v154, %v145
    %v163 = vsub.s32 %v154, %v146
    %v164 = vsub.s32 %v154, %v147
    %v165 = vsub.s32 %v154, %v148
    %v166 = vsub.s32 %v154, %v149
    %v167 = vsub.s32 %v154, %v150
    %v168 = vsub.s32 %v154, %v151
    %v169 = vsub.s32 %v154, %v152
    %v170 = vsub.s32 %v154, %v153
    %vm171 = vcmp.ge.s32.totalorder %v155, 0
    %vm172 = vcmp.ge.s32.totalorder %v156, 0
    %vm173 = vcmp.ge.s32.totalorder %v157, 0
    %vm174 = vcmp.ge.s32.totalorder %v158, 0
    %vm175 = vcmp.ge.s32.totalorder %v159, 0
    %vm176 = vcmp.ge.s32.totalorder %v160, 0
    %vm177 = vcmp.ge.s32.totalorder %v161, 0
    %vm178 = vcmp.ge.s32.totalorder %v162, 0
    %vm179 = vcmp.ge.s32.totalorder %v163, 0
    %vm180 = vcmp.ge.s32.totalorder %v164, 0
    %vm181 = vcmp.ge.s32.totalorder %v165, 0
    %vm182 = vcmp.ge.s32.totalorder %v166, 0
    %vm183 = vcmp.ge.s32.totalorder %v167, 0
    %vm184 = vcmp.ge.s32.totalorder %v168, 0
    %vm185 = vcmp.ge.s32.totalorder %v169, 0
    %vm186 = vcmp.ge.s32.totalorder %v170, 0
    %vm187 = vcmp.gt.s32.totalorder %v155, 0
    %v188 = vsel %vm187, %v155, 0
    %vm189 = vcmp.gt.s32.totalorder %v156, 0
    %v190 = vsel %vm189, %v156, 0
    %vm191 = vcmp.gt.s32.totalorder %v157, 0
    %v192 = vsel %vm191, %v157, 0
    %vm193 = vcmp.gt.s32.totalorder %v158, 0
    %v194 = vsel %vm193, %v158, 0
    %vm195 = vcmp.gt.s32.totalorder %v159, 0
    %v196 = vsel %vm195, %v159, 0
    %vm197 = vcmp.gt.s32.totalorder %v160, 0
    %v198 = vsel %vm197, %v160, 0
    %vm199 = vcmp.gt.s32.totalorder %v161, 0
    %v200 = vsel %vm199, %v161, 0
    %vm201 = vcmp.gt.s32.totalorder %v162, 0
    %v202 = vsel %vm201, %v162, 0
    %vm203 = vcmp.gt.s32.totalorder %v163, 0
    %v204 = vsel %vm203, %v163, 0
    %vm205 = vcmp.gt.s32.totalorder %v164, 0
    %v206 = vsel %vm205, %v164, 0
    %vm207 = vcmp.gt.s32.totalorder %v165, 0
    %v208 = vsel %vm207, %v165, 0
    %vm209 = vcmp.gt.s32.totalorder %v166, 0
    %v210 = vsel %vm209, %v166, 0
    %vm211 = vcmp.gt.s32.totalorder %v167, 0
    %v212 = vsel %vm211, %v167, 0
    %vm213 = vcmp.gt.s32.totalorder %v168, 0
    %v214 = vsel %vm213, %v168, 0
    %vm215 = vcmp.gt.s32.totalorder %v169, 0
    %v216 = vsel %vm215, %v169, 0
    %vm217 = vcmp.gt.s32.totalorder %v170, 0
    %v218 = vsel %vm217, %v170, 0
    %v219 = vcvt.s32.f32 %v188
    %v220 = vcvt.s32.f32 %v190
    %v221 = vcvt.s32.f32 %v192
    %v222 = vcvt.s32.f32 %v194
    %v223 = vcvt.s32.f32 %v196
    %v224 = vcvt.s32.f32 %v198
    %v225 = vcvt.s32.f32 %v200
    %v226 = vcvt.s32.f32 %v202
    %v227 = vcvt.s32.f32 %v204
    %v228 = vcvt.s32.f32 %v206
    %v229 = vcvt.s32.f32 %v208
    %v230 = vcvt.s32.f32 %v210
    %v231 = vcvt.s32.f32 %v212
    %v232 = vcvt.s32.f32 %v214
    %v233 = vcvt.s32.f32 %v216
    %v234 = vcvt.s32.f32 %v218
    %v235 = vstv %s25
    %v236 = vmul.f32 %v219, %v235
    %v237 = vmul.f32 %v220, %v235
    %v238 = vmul.f32 %v221, %v235
    %v239 = vmul.f32 %v222, %v235
    %v240 = vmul.f32 %v223, %v235
    %v241 = vmul.f32 %v224, %v235
    %v242 = vmul.f32 %v225, %v235
    %v243 = vmul.f32 %v226, %v235
    %v244 = vmul.f32 %v227, %v235
    %v245 = vmul.f32 %v228, %v235
    %v246 = vmul.f32 %v229, %v235
    %v247 = vmul.f32 %v230, %v235
    %v248 = vmul.f32 %v231, %v235
    %v249 = vmul.f32 %v232, %v235
    %v250 = vmul.f32 %v233, %v235
    %v251 = vmul.f32 %v234, %v235
    %v252 = vmul.f32 %v236, 1.442695
    %v253 = vpow.pop %v252
    %v254 = vmul.f32 %v237, 1.442695
    %v255 = vpow.pop %v254
    %v256 = vmul.f32 %v238, 1.442695
    %v257 = vpow.pop %v256
    %v258 = vmul.f32 %v239, 1.442695
    %v259 = vpow.pop %v258
    %v260 = vmul.f32 %v240, 1.442695
    %v261 = vpow.pop %v260
    %v262 = vmul.f32 %v241, 1.442695
    %v263 = vpow.pop %v262
    %v264 = vmul.f32 %v242, 1.442695
    %v265 = vpow.pop %v264
    %v266 = vmul.f32 %v243, 1.442695
    %v267 = vpow.pop %v266
    %v268 = vmul.f32 %v244, 1.442695
    %v269 = vpow.pop %v268
    %v270 = vmul.f32 %v245, 1.442695
    %v271 = vpow.pop %v270
    %v272 = vmul.f32 %v246, 1.442695
    %v273 = vpow.pop %v272
    %v274 = vmul.f32 %v247, 1.442695
    %v275 = vpow.pop %v274
    %v276 = vmul.f32 %v248, 1.442695
    %v277 = vpow.pop %v276
    %v278 = vmul.f32 %v249, 1.442695
    %v279 = vpow.pop %v278
    %v280 = vmul.f32 %v250, 1.442695
    %v281 = vpow.pop %v280
    %v282 = vmul.f32 %v251, 1.442695
    %v283 = vpow.pop %v282
    %v284 = vsel %vm171, %v253, 0.0
    %v285 = vsel %vm172, %v255, 0.0
    %v286 = vsel %vm173, %v257, 0.0
    %v287 = vsel %vm174, %v259, 0.0
    %v288 = vsel %vm175, %v261, 0.0
    %v289 = vsel %vm176, %v263, 0.0
    %v290 = vsel %vm177, %v265, 0.0
    %v291 = vsel %vm178, %v267, 0.0
    %v292 = vsel %vm179, %v269, 0.0
    %v293 = vsel %vm180, %v271, 0.0
    %v294 = vsel %vm181, %v273, 0.0
    %v295 = vsel %vm182, %v275, 0.0
    %v296 = vsel %vm183, %v277, 0.0
    %v297 = vsel %vm184, %v279, 0.0
    %v298 = vsel %vm185, %v281, 0.0
    %v299 = vsel %vm186, %v283, 0.0
    %300 = vmatprep.subr.mxu0 0.0
    %301 = vmatpush1.msra.mxu0 %v284
    %302 = vmatprep.subr.mxu0 0.0
    %303 = vmatpush1.msra.mxu0 %v285
    %304 = vmatprep.subr.mxu0 0.0
    %305 = vmatpush1.msra.mxu0 %v286
    %306 = vmatprep.subr.mxu0 0.0
    %307 = vmatpush1.msra.mxu0 %v287
    %308 = vmatprep.subr.mxu0 0.0
    %309 = vmatpush1.msra.mxu0 %v288
    %310 = vmatprep.subr.mxu0 0.0
    %311 = vmatpush1.msra.mxu0 %v289
    %312 = vmatprep.subr.mxu0 0.0
    %313 = vmatpush1.msra.mxu0 %v290
    %314 = vmatprep.subr.mxu0 0.0
    %315 = vmatpush1.msra.mxu0 %v291
    %316 = vmatprep.subr.mxu0 0.0
    %317 = vmatpush1.msra.mxu0 %v292
    %318 = vmatprep.subr.mxu0 0.0
    %319 = vmatpush1.msra.mxu0 %v293
    %320 = vmatprep.subr.mxu0 0.0
    %321 = vmatpush1.msra.mxu0 %v294
    %322 = vmatprep.subr.mxu0 0.0
    %323 = vmatpush1.msra.mxu0 %v295
    %324 = vmatprep.subr.mxu0 0.0
    %325 = vmatpush1.msra.mxu0 %v296
    %326 = vmatprep.subr.mxu0 0.0
    %327 = vmatpush1.msra.mxu0 %v297
    %328 = vmatprep.subr.mxu0 0.0
    %329 = vmatpush1.msra.mxu0 %v298
    %330 = vmatprep.subr.mxu0 0.0
    %331 = vmatpush1.msra.mxu0 %v299
    %332 = vmatprep.subr.mxu0 0.0
    %333 = vmatpush1.msra.mxu0 0.0
    %334 = vmatprep.subr.mxu0 0.0
    %335 = vmatpush1.msra.mxu0 0.0
    %336 = vmatprep.subr.mxu0 0.0
    %337 = vmatpush1.msra.mxu0 0.0
    %338 = vmatprep.subr.mxu0 0.0
    %339 = vmatpush1.msra.mxu0 0.0
    %340 = vmatprep.subr.mxu0 0.0
    %341 = vmatpush1.msra.mxu0 0.0
    %342 = vmatprep.subr.mxu0 0.0
    %343 = vmatpush1.msra.mxu0 0.0
    %344 = vmatprep.subr.mxu0 0.0
    %345 = vmatpush1.msra.mxu0 0.0
    %346 = vmatprep.subr.mxu0 0.0
    %347 = vmatpush1.msra.mxu0 0.0
    %348 = vmatprep.subr.mxu0 0.0
    %349 = vmatpush1.msra.mxu0 0.0
    %350 = vmatprep.subr.mxu0 0.0
    %351 = vmatpush1.msra.mxu0 0.0
    %352 = vmatprep.subr.mxu0 0.0
    %353 = vmatpush1.msra.mxu0 0.0
    %354 = vmatprep.subr.mxu0 0.0
    %355 = vmatpush1.msra.mxu0 0.0
    %356 = vmatprep.subr.mxu0 0.0
    %357 = vmatpush1.msra.mxu0 0.0
    %358 = vmatprep.subr.mxu0 0.0
    %359 = vmatpush1.msra.mxu0 0.0
    %360 = vmatprep.subr.mxu0 0.0
    %361 = vmatpush1.msra.mxu0 0.0
    %362 = vmatprep.subr.mxu0 0.0
    %363 = vmatpush1.msra.mxu0 0.0
    %364 = vmatprep.mubr.f32.mxu0 0.0
    %365 = vmatmul.mubr.f32.gmra.mrb[0].mxu0 %v138
    %v366 = vpop.f32.mrb[0].mxu0
    %v367 = vadd.f32 0.0, %v366
    %v368 = vpop.f32.mrb[0].mxu0
    %369 = vdwg.mxu0
    %v370 = vsub.s32 %v133, 2
    %vm371 = vcmp.gt.s32.totalorder %v370, 0
    %v372 = vsel %vm371, %v370, 0
    %vm373 = vcmp.lt.s32.totalorder %v41, %v372
    %v374 = vsel %vm373, %v41, %v372
    %v375 = vcvt.s32.f32 %v374
    %v376 = vmul.f32 %v375, %v235
    %v377 = vmul.f32 %v376, 1.442695
    %v378 = vpow.pop %v377
    %v379 = vld [vmem:[#allocation2] sm:$0x1]
    %381 = vset.pattern.permute.xlu0 0
    %382 = vperm.xlu0 %381, %v379
    %v383 = vpop.permute.xlu0 %382
    %v385 = vlaneseq
    %v386 = vshrl.u32 %v385, 7
    %v387 = vsub.s32 0, %v386
    %v388 = vrot.slane %v383, %v387
    %v389 = vmul.f32 %v378, %v388
    %v390 = vadd.f32 %v389, %v367
    %v391 = vstv %s27
    %v392 = vmul.f32 %v391, %v390
    %v394 = vrot.slane %v129, 1
    %v396 = vadd.f32 %v392, %v394
    %s397 = sadd.s32 %s30, 126
    %p398 = scmp.gt.s32.totalorder %s397, 0
    %s399 = scalar_select %p398, %s397, 0
    %p400 = scmp.lt.s32.totalorder %s399, 128
    %s401 = scalar_select %p400, %s399, 128
    %v402 = vstv %s401
    %v403 = vcvt.s32.f32 %v402
    %v404 = vmul.f32 %v403, %v235
    %v405 = vmul.f32 %v404, 1.442695
    %v406 = vpow.pop %v405
    %v407 = vsub.s32 127, %v41
    %v408 = vcvt.s32.f32 %v407
    %v409 = vmul.f32 %v408, %v235
    %v410 = vmul.f32 %v409, 1.442695
    %v411 = vpow.pop %v410
    %v412 = vmul.f32 %v411, %v138
    %vm413 = vcmask 1040384
    %v414 = vsel %vm413, %v412, 0.0
    %415 = vadd.xlane.f32.xlu0 %v414
    %v416 = vpop.xlane.xlu0 %415
    %v417 = vmul.f32 %v406, %v379
    %v418 = vadd.f32 %v417, %v416
    %vm419 = vcmask 0
    %420 = vst.msk [vmem:[#allocation2] sm:$0x1] %vm419, %v418
    %vm421 = vcmp.lt.s32.totalorder %v133, 16
    %vm422 = vmand %vm134, %vm421
    %v423 = vstv %s28
    %v424 = vmul.f32 %v423, %v396
    %v425 = vsel %vm422, %v424, 0.0
    %426 = vst [vmem:[%s2] sm:$0x1] %v425
    %v427 = vsel %vm422, %v396, 0.0
    %428 = vst [vmem:[%s2 + $0x1] sm:$0x1] %v427
    %v429 = vsel %vm422, %v423, 0.0
    %430 = vst [vmem:[%s2 + $0x2] sm:$0x1] %v429
    %v431 = vstv %s29
    %v432 = vsel %vm422, %v431, 0.0
    %433 = vst [vmem:[%s2 + $0x3] sm:$0x1] %v432
    %434 = vst [vmem:[%s2 + $0x4] sm:$0xf] 0.0
    // Predicated region
    $region18: #{mcpbrnn_gw_constant_routing.1} parent=1 // pred_check
      _
    $region19: #{mcpbrnn_gw_constant_routing.1} parent=1 // pred_check_branch
      %436 = sbr.rel (0) target = $region21
    $region20: #{mcpbrnn_gw_constant_routing.1} parent=1 // pred_region
      _
    $region21: #{mcpbrnn_gw_constant_routing.1} parent=1 // pred_fallthru
      _
    // Predicated region
    $region22: #{mcpbrnn_gw_constant_routing.1} parent=1 // pred_check
      _
    $region23: #{mcpbrnn_gw_constant_routing.1} parent=1 // pred_check_branch
      %438 = sbr.rel (0) target = $region25
    $region24: #{mcpbrnn_gw_constant_routing.1} parent=1 // pred_region
      _
    $region25: #{mcpbrnn_gw_constant_routing.1} parent=1 // pred_fallthru
      _
    %439 = vsyncpa [#allocation4], 1

</llo_original>
